<compile_context>
chip_gen: v7x
topology: tpu7x:2x2x1
jax: 0.10.0
libtpu: 0.0.40
codegen_flags: <defaults>
</compile_context>

<pallas_src>
import jax
import jax.numpy as jnp
from jax.experimental import pallas as pl
from jax.experimental.pallas import tpu as pltpu


def _round_up(x, m):
    return ((x + m - 1) // m) * m


def _sublane_align(dtype):
    # Sub-32-bit dtypes pack along sublanes (bf16 vreg = [16,128], int8 = [32,128]).
    return max(8, 32 // jnp.dtype(dtype).itemsize)


def _pick_channel_tile(c, cap, align):
    """Largest divisor of c that is a multiple of `align` and <= cap, else full c."""
    if c <= cap:
        return c
    t = cap - (cap % align)
    while t >= align:
        if c % t == 0:
            return t
        t -= align
    return c


def _vmem_budgets():
    """Per-generation (per-input-block byte budget, vmem_limit_bytes)."""
    try:
        vmem_cap = pltpu.get_tpu_info().vmem_capacity_bytes
    except Exception:
        vmem_cap = 64 * 1024 * 1024  # conservative (v7x-class) fallback
    if vmem_cap <= 64 * 1024 * 1024:          # v7x: 64 MiB physical VMEM per TC
        return 8 * 1024 * 1024, 48 * 1024 * 1024
    return 16 * 1024 * 1024, 80 * 1024 * 1024  # v5e / v6e: 128 MiB physical VMEM


def _make_pool_sum_kernel(hw_tile, rem, n_slab):
    """Pass-1 kernel: tiled global-sum over HW.

    hw_tile: lanes per HW tile (multiple of 128).
    rem:     number of valid lanes in the LAST HW tile (0 => exact division).
    n_slab:  hw_tile // 128.
    """

    def kernel(x_ref, out_ref, acc_ref):
        # x_ref:   (cin_tile, hw_tile)  one (batch, cin-tile, hw-tile) block
        # out_ref: (cin_tile, 1)        per-channel sums for this (batch, cin-tile)
        # acc_ref: (cin_tile, 128) f32  lane-parallel accumulator (resident over t)
        t = pl.program_id(2)

        @pl.when(t == 0)
        def _():
            acc_ref[...] = jnp.zeros_like(acc_ref)

        if rem:
            is_last = t == pl.num_programs(2) - 1
            n_valid = jnp.where(is_last, rem, hw_tile)

        # Lane-parallel accumulation: VPU adds over 128-lane slabs (f32 accum is
        # safe for bf16 inputs); the boundary tile's out-of-range lanes (which
        # contain unspecified data on TPU) are zeroed before accumulation.
        for k in range(n_slab):
            v = x_ref[:, pl.ds(k * 128, 128)].astype(jnp.float32)
            if rem:
                lane = jax.lax.broadcasted_iota(jnp.int32, v.shape, 1) + (k * 128)
                v = jnp.where(lane < n_valid, v, 0.0)
            acc_ref[...] += v

        @pl.when(t == pl.num_programs(2) - 1)
        def _():
            # Single cross-lane (XLU) reduce only at finalize.
            out_ref[...] = jnp.sum(acc_ref[...], axis=1, keepdims=True)

    return kernel


def _broadcast_kernel(y_ref, out_ref):
    # y_ref:   (Cout, 1)            post conv/BN/ReLU vector for this batch element
    # out_ref: (Cout, hw_tile_out)  lane-dense output tile (multiple of 128 lanes)
    out_ref[...] = jnp.broadcast_to(y_ref[...], out_ref.shape).astype(out_ref.dtype)


def global_avg_pooling_forward(x, conv_w, bn_gamma, bn_beta, bn_mean, bn_var,
                               eps=1e-5):
    """x: (N, Cin, H, W) NCHW.  conv_w: (Cout, Cin, 1, 1).  Returns (N, Cout, H, W)."""
    n, cin, h, w = x.shape
    cout = conv_w.shape[0]
    hw = h * w

    itemsize = jnp.dtype(x.dtype).itemsize
    in_block_budget, vmem_limit = _vmem_budgets()

    # ---- Pass-1 tiling --------------------------------------------------------
    align = _sublane_align(x.dtype)
    cin_tile = _pick_channel_tile(cin, 512, align)
    # v7x megacore: keep >= 2 parallel grid points so the 2nd TensorCore isn't idle.
    if n * (cin // cin_tile) < 2 and cin_tile % (2 * align) == 0:
        cin_tile //= 2

    max_hw_tile = max(128, (in_block_budget // (cin_tile * itemsize)) // 128 * 128)
    hw_tile = min(max_hw_tile, _round_up(hw, 128))
    hw_tiles = pl.cdiv(hw, hw_tile)
    rem = hw % hw_tile          # valid lanes in the last (boundary) HW tile
    n_slab = hw_tile // 128

    x2 = x.reshape(n, cin, hw)  # no jnp.pad: boundary tile is masked in-kernel

    # ---- Pass 1: tiled global-sum reduction over HW -> (N, Cin, 1) f32 sums ----
    pooled = pl.pallas_call(
        _make_pool_sum_kernel(hw_tile, rem, n_slab),
        out_shape=jax.ShapeDtypeStruct((n, cin, 1), jnp.float32),
        grid_spec=pltpu.PrefetchScalarGridSpec(
            num_scalar_prefetch=0,
            grid=(n, cin // cin_tile, hw_tiles),
            in_specs=[
                pl.BlockSpec((pl.Squeezed(), cin_tile, hw_tile),
                             lambda i, c, t: (i, c, t)),
            ],
            out_specs=pl.BlockSpec((pl.Squeezed(), cin_tile, 1),
                                   lambda i, c, t: (i, c, 0)),
            scratch_shapes=[pltpu.VMEM((cin_tile, 128), jnp.float32)],
        ),
        compiler_params=pltpu.CompilerParams(
            dimension_semantics=("parallel", "parallel", "arbitrary"),
            vmem_limit_bytes=vmem_limit),
    )(x2)

    # ---- Middle: tiny 1x1 conv + folded eval-mode BN (+ 1/HW) + ReLU ----------
    scale = (bn_gamma.astype(jnp.float32)
             / jnp.sqrt(bn_var.astype(jnp.float32) + eps))                 # (Cout,)
    shift = bn_beta.astype(jnp.float32) - bn_mean.astype(jnp.float32) * scale
    # Fold BN scale and the 1/HW mean factor into the weight: sums @ w == mean conv.
    w_folded = (conv_w[:, :, 0, 0].astype(jnp.float32)
                * scale[:, None]).T * (1.0 / hw)                           # (Cin, Cout)
    y = jnp.maximum(pooled[:, :, 0] @ w_folded + shift, 0.0)               # (N, Cout) f32

    # ---- Pass 2: lane-dense broadcast over HW -> (N, Cout, HW) ----------------
    max_hw_tile_out = max(128, (in_block_budget // (cout * itemsize)) // 128 * 128)
    hw_tile_out = min(max_hw_tile_out, _round_up(hw, 128))

    y3 = y.reshape(n, cout, 1)
    out2 = pl.pallas_call(
        _broadcast_kernel,
        out_shape=jax.ShapeDtypeStruct((n, cout, hw), x.dtype),
        grid_spec=pltpu.PrefetchScalarGridSpec(
            num_scalar_prefetch=0,
            grid=(n, pl.cdiv(hw, hw_tile_out)),
            in_specs=[
                pl.BlockSpec((pl.Squeezed(), cout, 1),
                             lambda i, t: (i, 0, 0)),
            ],
            # Out-of-bounds lanes of the boundary output block are dropped by
            # Pallas on writeback, so no padding / trailing slice is needed.
            out_specs=pl.BlockSpec((pl.Squeezed(), cout, hw_tile_out),
                                   lambda i, t: (i, 0, t)),
        ),
        compiler_params=pltpu.CompilerParams(
            dimension_semantics=("parallel", "parallel"),
            vmem_limit_bytes=vmem_limit),
    )(y3)

    return out2.reshape(n, cout, h, w)


def _reference(x, conv_w, bn_gamma, bn_beta, bn_mean, bn_var, eps=1e-5):
    xf = x.astype(jnp.float32)
    pool = jnp.mean(xf, axis=(2, 3))                             # (N, Cin)
    y = pool @ conv_w[:, :, 0, 0].astype(jnp.float32).T          # (N, Cout)
    y = (y - bn_mean) / jnp.sqrt(bn_var + eps) * bn_gamma + bn_beta
    y = jnp.maximum(y, 0.0)
    n, cout = y.shape
    h, w = x.shape[2], x.shape[3]
    return jnp.broadcast_to(y[:, :, None, None], (n, cout, h, w)).astype(x.dtype)


if __name__ == "__main__":
    key = jax.random.PRNGKey(0)
    k_x, k_w, k_g, k_b, k_m, k_v = jax.random.split(key, 6)

    N, Cin, Cout, H, W = 2, 4, 8, 16, 16

    x = jax.random.normal(k_x, (N, Cin, H, W), dtype=jnp.float32)
    # Deterministic parameter init (shapes from the module __init__).
    conv_w = jax.random.normal(k_w, (Cout, Cin, 1, 1), dtype=jnp.float32) * 0.1
    bn_gamma = 1.0 + 0.1 * jax.random.normal(k_g, (Cout,), dtype=jnp.float32)
    bn_beta = 0.1 * jax.random.normal(k_b, (Cout,), dtype=jnp.float32)
    bn_mean = 0.05 * jax.random.normal(k_m, (Cout,), dtype=jnp.float32)
    bn_var = jnp.abs(jax.random.normal(k_v, (Cout,), dtype=jnp.float32)) + 0.5

    out = global_avg_pooling_forward(x, conv_w, bn_gamma, bn_beta, bn_mean, bn_var)
    out = jax.block_until_ready(out)

    ref = _reference(x, conv_w, bn_gamma, bn_beta, bn_mean, bn_var)
    assert out.shape == (N, Cout, H, W)
    assert jnp.allclose(out, ref, atol=1e-5, rtol=1e-5)

    print("KERNEL_OK")
</pallas_src>

<mosaic_0001>
module attributes {stable_mosaic.version = 11 : i64} {
  func.func @kernel(%arg0: i32, %arg1: i32, %arg2: i32, %arg3: memref<1x4x256xf32, #tpu.memory_space<vmem>>, %arg4: memref<1x4x1xf32, #tpu.memory_space<vmem>>, %arg5: memref<4x128xf32, #tpu.memory_space<vmem>>) attributes {dimension_semantics = [#tpu.dimension_semantics<parallel>, #tpu.dimension_semantics<parallel>, #tpu.dimension_semantics<arbitrary>], iteration_bounds = array<i64: 2, 1, 1>, scalar_prefetch = 0 : i64, scratch_operands = 1 : i64, tpu.core_type = #tpu.core_type<tc>, window_params = [{transform_indices = @transform_0, window_bounds = array<i64: 1, 4, 256>}, {transform_indices = @transform_1, window_bounds = array<i64: 1, 4, 1>}]} {
    %c0_i32 = arith.constant 0 : i32
    %0 = arith.cmpi eq, %arg2, %c0_i32 : i32
    %1 = arith.extui %0 : i1 to i32
    %c0_i32_0 = arith.constant 0 : i32
    %2 = arith.cmpi ne, %1, %c0_i32_0 : i32
    scf.if %2 {
      %cst = arith.constant 0.000000e+00 : f32
      %16 = vector.broadcast %cst : f32 to vector<4x128xf32>
      %c0_15 = arith.constant 0 : index
      %c0_16 = arith.constant 0 : index
      %17 = vector.load %arg5[%c0_15, %c0_16] : memref<4x128xf32, #tpu.memory_space<vmem>>, vector<4x128xf32>
      tpu.vector_store %arg5[%c0_15, %c0_16], %16 {strides = array<i32>} : memref<4x128xf32, #tpu.memory_space<vmem>>, vector<4x128xf32>,
    } else {
    }
    %c0 = arith.constant 0 : index
    %c0_1 = arith.constant 0 : index
    %c0_2 = arith.constant 0 : index
    %3 = vector.load %arg3[%c0, %c0_1, %c0_2] : memref<1x4x256xf32, #tpu.memory_space<vmem>>, vector<1x4x128xf32>
    %4 = vector.shape_cast %3 : vector<1x4x128xf32> to vector<4x128xf32>
    %c0_3 = arith.constant 0 : index
    %c0_4 = arith.constant 0 : index
    %5 = vector.load %arg5[%c0_3, %c0_4] : memref<4x128xf32, #tpu.memory_space<vmem>>, vector<4x128xf32>
    %6 = arith.addf %5, %4 : vector<4x128xf32>
    %c0_5 = arith.constant 0 : index
    %c0_6 = arith.constant 0 : index
    %7 = vector.load %arg5[%c0_5, %c0_6] : memref<4x128xf32, #tpu.memory_space<vmem>>, vector<4x128xf32>
    tpu.vector_store %arg5[%c0_5, %c0_6], %6 {strides = array<i32>} : memref<4x128xf32, #tpu.memory_space<vmem>>, vector<4x128xf32>,
    %c0_7 = arith.constant 0 : index
    %c0_8 = arith.constant 0 : index
    %c128 = arith.constant 128 : index
    %8 = vector.load %arg3[%c0_7, %c0_8, %c128] : memref<1x4x256xf32, #tpu.memory_space<vmem>>, vector<1x4x128xf32>
    %9 = vector.shape_cast %8 : vector<1x4x128xf32> to vector<4x128xf32>
    %c0_9 = arith.constant 0 : index
    %c0_10 = arith.constant 0 : index
    %10 = vector.load %arg5[%c0_9, %c0_10] : memref<4x128xf32, #tpu.memory_space<vmem>>, vector<4x128xf32>
    %11 = arith.addf %10, %9 : vector<4x128xf32>
    %c0_11 = arith.constant 0 : index
    %c0_12 = arith.constant 0 : index
    %12 = vector.load %arg5[%c0_11, %c0_12] : memref<4x128xf32, #tpu.memory_space<vmem>>, vector<4x128xf32>
    tpu.vector_store %arg5[%c0_11, %c0_12], %11 {strides = array<i32>} : memref<4x128xf32, #tpu.memory_space<vmem>>, vector<4x128xf32>,
    %c0_i32_13 = arith.constant 0 : i32
    %13 = arith.cmpi eq, %arg2, %c0_i32_13 : i32
    %14 = arith.extui %13 : i1 to i32
    %c0_i32_14 = arith.constant 0 : i32
    %15 = arith.cmpi ne, %14, %c0_i32_14 : i32
    scf.if %15 {
      %c0_15 = arith.constant 0 : index
      %c0_16 = arith.constant 0 : index
      %16 = vector.load %arg5[%c0_15, %c0_16] : memref<4x128xf32, #tpu.memory_space<vmem>>, vector<4x128xf32>
      %cst = arith.constant dense<0.000000e+00> : vector<4xf32>
      %17 = vector.multi_reduction <add>, %16, %cst [1] : vector<4x128xf32> to vector<4xf32>
      %18 = vector.shape_cast %17 : vector<4xf32> to vector<4x1xf32>
      %c0_17 = arith.constant 0 : index
      %c0_18 = arith.constant 0 : index
      %c0_19 = arith.constant 0 : index
      %19 = vector.load %arg4[%c0_17, %c0_18, %c0_19] : memref<1x4x1xf32, #tpu.memory_space<vmem>>, vector<1x4x1xf32>
      %20 = vector.shape_cast %19 : vector<1x4x1xf32> to vector<4x1xf32>
      %21 = vector.shape_cast %18 : vector<4x1xf32> to vector<1x4x1xf32>
      tpu.vector_store %arg4[%c0_17, %c0_18, %c0_19], %21 {strides = array<i32>} : memref<1x4x1xf32, #tpu.memory_space<vmem>>, vector<1x4x1xf32>,
    } else {
    }
    return
  }
  func.func @transform_0(%arg0: i32, %arg1: i32, %arg2: i32) -> (i32, i32, i32) {
    %c0_i32 = arith.constant 0 : i32
    return %arg0, %arg1, %arg2 : i32, i32, i32
  }
  func.func @transform_1(%arg0: i32, %arg1: i32, %arg2: i32) -> (i32, i32, i32) {
    %c0_i32 = arith.constant 0 : i32
    %c0_i32_0 = arith.constant 0 : i32
    return %arg0, %arg1, %c0_i32 : i32, i32, i32
  }
}

</mosaic_0001>

<llo_original>
// kernel: tpu_custom_call.1
$region0: #{tpu_custom_call.1}
  #allocation0 [shape = 'u32[]', space=smem, size = 0x4, offset = 0x4, fixed_abs, tag = 'smem constant byte address 0x4 - core index']
  #allocation1 [shape = 'u32[144,128]{1,0:T(1,128)}', space=vmem, size = 0x12000, scoped, tag = 'internal scratch']
  #allocation2 [shape = 'f32[4,128]{1,0:T(4,128)}', space=vmem, size = 0x800, scoped, tag = 'scratch operand']
  %s0 = inlined_call_operand.hbm [shape: f32[2,4,256], index: 0, kind: input, shape index: {}]
  %s1 = inlined_call_operand.vmem [shape: f32[2,4,1], index: 1, kind: output, shape index: {}]
  %s2 = sld [smem:[#allocation0]]
  $region49: #{tpu_custom_call.1} parent=0
    _
  %s4 = ssub.s32 1, %s2
  %s5 = scalar_select 0, %s4, %s2
  $region1: #{tpu_custom_call.1} parent=0
    #allocation3 [shape = 'u8[8192]{0}', space=vmem, size = 0x2000, scoped, tag = 'input window, operand 0']
    #allocation4 [shape = 's32[2]{0}', space=sflag, size = 0x8, scoped, tag = 'scoped memory for tpu_custom_call.1']
    %6 = vsyncpa [#allocation4], 0
    %s7 = scalar_lea.sflag [#allocation4], 1
    %8 = vsyncpa %s7, 0
    loop: start=0, step=1, limit=4
    $region2: #{tpu_custom_call.1} parent=1 // loop_pre_header
      _
    $region3: #{tpu_custom_call.1} parent=1 // loop_header
      %s10 = sphi 0, %s14
      %p11 = scmp.ge.s32.totalorder %s10, 4
      %s17 = sphi 0, %s36
      %s18 = sphi 0, %s32
      %s19 = sphi 0, %s28
      %s20 = sphi 0, %s17
      %s21 = sphi 0, %s18
      %s22 = sphi 0, %s19
      %s23 = sphi 0, %s20
      %s24 = sphi 0, %s21
      %s25 = sphi 0, %s22
      %s43 = sphi 0, %s45
      %s46 = sphi 0, %s43
      %s47 = sphi 0, %s46
      %s63 = sphi 0, %s47
      %s71 = sphi 0, %s73
      %s74 = sphi 0, %s71
      %s75 = sphi 0, %s74
      %s91 = sphi 0, %s75
    $region4: #{tpu_custom_call.1} parent=1 // loop_header_branch
      %13 = sbr.rel (%p11) target = $region8
    $region5: #{tpu_custom_call.1} parent=1 // loop_body
      %s15 = ssub.s32 %s10, 1
      %s16 = ssub.s32 %s10, 2
      %s26 = sadd.s32 1, %s19
      %p27 = scmp.ge.s32.totalorder %s26, 1
      %s28 = scalar_select %p27, 0, %s26
      %s29 = sadd.s32 1, %s18
      %s30 = scalar_select %p27, %s29, %s18
      %p31 = scmp.ge.s32.totalorder %s30, 1
      %s32 = scalar_select %p31, 0, %s30
      %s33 = sadd.s32 1, %s17
      %s34 = scalar_select %p31, %s33, %s17
      %p35 = scmp.ge.s32.totalorder %s34, 2
      %s36 = scalar_select %p35, 0, %s34
      %s37 = ssub.s32 %s17, %s36
      %s38 = ssub.s32 %s18, %s32
      %s39 = sor.u32 %s37, %s38
      %s40 = ssub.s32 %s19, %s28
      %s41 = sor.u32 %s39, %s40
      %p42 = scmp.eq.s32.totalorder %s41, 0
      %s44 = sadd.s32 %s43, 1
      %s45 = scalar_select %p42, %s43, %s44
      %p48 = pneg %p42
      %p49 = scmp.eq.s32.totalorder %s10, 1
      %p50 = por %p48, %p49
      %p51 = scmp.ne.s32.totalorder %s43, %s46
      %p52 = scmp.eq.s32.totalorder %s10, 0
      %p53 = por %p51, %p52
      %p54 = scmp.ne.s32.totalorder %s43, %s46
      %p55 = scmp.eq.s32.totalorder %s15, 1
      %p56 = por %p54, %p55
      %p57 = scmp.ne.s32.totalorder %s46, %s47
      %p58 = scmp.eq.s32.totalorder %s15, 0
      %p59 = por %p57, %p58
      %p60 = scmp.ne.s32.totalorder %s46, %s47
      %p61 = scmp.eq.s32.totalorder %s16, 1
      %p62 = por %p60, %p61
      %p64 = scmp.ne.s32.totalorder %s47, %s63
      %p65 = scmp.eq.s32.totalorder %s16, 0
      %p66 = por %p64, %p65
      %s67 = ssub.s32 %s17, %s36
      %s68 = ssub.s32 %s18, %s32
      %s69 = sor.u32 %s67, %s68
      %p70 = scmp.eq.s32.totalorder %s69, 0
      %s72 = sadd.s32 %s71, 1
      %s73 = scalar_select %p70, %s71, %s72
      %p76 = pneg %p70
      %p77 = scmp.eq.s32.totalorder %s10, 1
      %p78 = por %p76, %p77
      %p79 = scmp.ne.s32.totalorder %s71, %s74
      %p80 = scmp.eq.s32.totalorder %s10, 0
      %p81 = por %p79, %p80
      %p82 = scmp.ne.s32.totalorder %s71, %s74
      %p83 = scmp.eq.s32.totalorder %s15, 1
      %p84 = por %p82, %p83
      %p85 = scmp.ne.s32.totalorder %s74, %s75
      %p86 = scmp.eq.s32.totalorder %s15, 0
      %p87 = por %p85, %p86
      %p88 = scmp.ne.s32.totalorder %s74, %s75
      %p89 = scmp.eq.s32.totalorder %s16, 1
      %p90 = por %p88, %p89
      %p92 = scmp.ne.s32.totalorder %s75, %s91
      %p93 = scmp.eq.s32.totalorder %s16, 0
      %p94 = por %p92, %p93
      %p95 = scmp.le.s32.totalorder 1, %s10
      %p96 = scmp.lt.s32.totalorder %s10, 3
      %p97 = pnand %p95, %p96
      %p98 = pneg %p97
      // Predicated region
      $region9: #{tpu_custom_call.1} parent=5 // pred_check
        _
      $region10: #{tpu_custom_call.1} parent=5 // pred_check_branch
        %100 = sbr.rel (%p97) target = $region12
      $region11: #{tpu_custom_call.1} parent=5 // pred_region
        %s101 = ssub.s32 %s10, 1
      $region12: #{tpu_custom_call.1} parent=5 // pred_fallthru
        _
      %p102 = scmp.lt.s32.totalorder %s10, 2
      // Predicated region
      $region13: #{tpu_custom_call.1} parent=5 // pred_check
        %p103 = pneg %p102
      $region14: #{tpu_custom_call.1} parent=5 // pred_check_branch
        %105 = sbr.rel (%p103) target = $region16
      $region15: #{tpu_custom_call.1} parent=5 // pred_region
        // Predicated region
        $region17: #{tpu_custom_call.1} parent=15 // pred_check
          %p106 = pneg %p53
        $region18: #{tpu_custom_call.1} parent=15 // pred_check_branch
          %108 = sbr.rel (%p106) target = $region20
        $region19: #{tpu_custom_call.1} parent=15 // pred_region
          %s109 = sand.u32 %s43, 1
          %s110 = scalar_lea.sflag [#allocation4], %s109
          %s111 = sand.u32 %s43, 1
          %s112 = smul.addr %s111, 8
          %s113 = scalar_lea.vmem [#allocation3], %s112
          %s114 = smul.u32 2, %s19
          %s116 = ssub.s32 128, 128
          %117 = vsyncadd %s110, %s116
          %s118 = smul.addr %s18, 2
          %s119 = sadd.s32 %s114, %s118
          %s120 = smul.addr %s17, 2
          %s121 = sadd.s32 %s119, %s120
          %s122 = smul.addr %s121, 64
          %s123 = scalar_lea.hbm %s0, %s122
          %s125 = sshll.u32 %s113, 4
          %s126 = int_to_ptr.vmem [resolvable:$true] %s125
          %128 = dma.hbm_to_vmem [thread:$0]  %s123, 128, %s126, %s110
        $region20: #{tpu_custom_call.1} parent=15 // pred_fallthru
          _
      $region16: #{tpu_custom_call.1} parent=5 // pred_fallthru
        _
      %p129 = scmp.le.s32.totalorder 1, %s10
      %p130 = scmp.lt.s32.totalorder %s10, 3
      %p131 = pnand %p129, %p130
      %p132 = pneg %p131
      // Predicated region
      $region21: #{tpu_custom_call.1} parent=5 // pred_check
        _
      $region22: #{tpu_custom_call.1} parent=5 // pred_check_branch
        %134 = sbr.rel (%p131) target = $region24
      $region23: #{tpu_custom_call.1} parent=5 // pred_region
        %s135 = ssub.s32 %s10, 1
        %s136 = sand.u32 %s46, 1
        %s137 = scalar_lea.sflag [#allocation4], %s136
        %s138 = sand.u32 %s46, 1
        %s139 = smul.addr %s138, 8
        %s140 = scalar_lea.vmem [#allocation3], %s139
        // Predicated region
        $region25: #{tpu_custom_call.1} parent=23 // pred_check
          %p141 = pneg %p59
        $region26: #{tpu_custom_call.1} parent=23 // pred_check_branch
          %143 = sbr.rel (%p141) target = $region28
        $region27: #{tpu_custom_call.1} parent=23 // pred_region
          %144 = dma.done %s137, 128
        $region28: #{tpu_custom_call.1} parent=23 // pred_fallthru
          _
        %s145 = sand.u32 %s46, 1
        %s146 = scalar_lea.sflag [#allocation4], %s145
        %s147 = sand.u32 %s46, 1
        %s148 = smul.addr %s147, 8
        %s149 = scalar_lea.vmem [#allocation3], %s148
        %p150 = pneg %p59
        %p151 = pneg %p56
        %p152 = pneg %p87
        %p153 = pneg %p84
        %p154 = scmp.lt.s32.totalorder %s20, 1
        %s155 = scalar_select %p154, %s20, 1
        %p156 = scmp.lt.s32.totalorder %s21, 0
        %s157 = scalar_select %p156, %s21, 0
        %s158 = sadd.s32 %s157, %s155
        %s159 = smul.addr %s158, 4
        %s160 = scalar_lea.vmem %s1, %s159
        %s161 = smul.u32 2, %s22
        %p162 = scmp.lt.s32.totalorder %s20, 1
        %s163 = scalar_select %p162, %s20, 1
        %p164 = scmp.lt.s32.totalorder %s21, 0
        %s165 = scalar_select %p164, %s21, 0
        %s166 = sadd.s32 %s165, %s163
        %s167 = smul.addr %s166, 4
        %s168 = scalar_lea.vmem %s1, %s167
        %p169 = scmp.eq.s32.totalorder %s22, 0
        // Predicated region
        $region29: #{tpu_custom_call.1} parent=23 // pred_check
          %p170 = pneg %p169
        $region30: #{tpu_custom_call.1} parent=23 // pred_check_branch
          %172 = sbr.rel (%p170) target = $region32
        $region31: #{tpu_custom_call.1} parent=23 // pred_region
          %173 = vst [vmem:[#allocation2] sm:$0xf] 0.0
        $region32: #{tpu_custom_call.1} parent=23 // pred_fallthru
          _
        %v174 = vld [vmem:[%s140] sm:$0xf]
        %v175 = vld [vmem:[#allocation2] sm:$0xf]
        %v176 = vadd.f32 %v175, %v174
        %177 = vst [vmem:[#allocation2] sm:$0xf] %v176
        %v178 = vld [vmem:[%s140 + $0x4] sm:$0xf]
        %v179 = vld [vmem:[#allocation2] sm:$0xf]
        %v180 = vadd.f32 %v179, %v178
        %181 = vst [vmem:[#allocation2] sm:$0xf] %v180
        // Predicated region
        $region33: #{tpu_custom_call.1} parent=23 // pred_check
          %p182 = pneg %p169
        $region34: #{tpu_custom_call.1} parent=23 // pred_check_branch
          %184 = sbr.rel (%p182) target = $region36
        $region35: #{tpu_custom_call.1} parent=23 // pred_region
          %v185 = vld [vmem:[#allocation2] sm:$0xf]
          %vm186 = vcmask 1043456
          %v187 = vsel %vm186, %v185, 0.0
          %188 = vadd.xlane.f32.xlu0 %v187
          %v189 = vpop.xlane.xlu0 %188
          %vm190 = vcmask 3072
          %191 = vst.msk [vmem:[%s168] sm:$0xf] %vm190, %v189
        $region36: #{tpu_custom_call.1} parent=23 // pred_fallthru
          _
        %p192 = scmp.lt.s32.totalorder %s20, 1
        %s193 = scalar_select %p192, %s20, 1
        %p194 = scmp.lt.s32.totalorder %s21, 0
        %s195 = scalar_select %p194, %s21, 0
        %s196 = sadd.s32 %s195, %s193
        %s197 = smul.addr %s196, 4
        %s198 = scalar_lea.vmem %s1, %s197
        // Predicated region
        $region37: #{tpu_custom_call.1} parent=23 // pred_check
          %p199 = pneg %p84
        $region38: #{tpu_custom_call.1} parent=23 // pred_check_branch
          %201 = sbr.rel (%p199) target = $region40
        $region39: #{tpu_custom_call.1} parent=23 // pred_region
          _
        $region40: #{tpu_custom_call.1} parent=23 // pred_fallthru
          _
      $region24: #{tpu_custom_call.1} parent=5 // pred_fallthru
        _
      %p202 = scmp.le.s32.totalorder 2, %s10
      // Predicated region
      $region41: #{tpu_custom_call.1} parent=5 // pred_check
        %p203 = pneg %p202
      $region42: #{tpu_custom_call.1} parent=5 // pred_check_branch
        %205 = sbr.rel (%p203) target = $region44
      $region43: #{tpu_custom_call.1} parent=5 // pred_region
        %s206 = ssub.s32 %s10, 2
        // Predicated region
        $region45: #{tpu_custom_call.1} parent=43 // pred_check
          %p207 = pneg %p90
        $region46: #{tpu_custom_call.1} parent=43 // pred_check_branch
          %209 = sbr.rel (%p207) target = $region48
        $region47: #{tpu_custom_call.1} parent=43 // pred_region
          %p210 = scmp.lt.s32.totalorder %s23, 1
          %s211 = scalar_select %p210, %s23, 1
          %p212 = scmp.lt.s32.totalorder %s24, 0
          %s213 = scalar_select %p212, %s24, 0
          %s214 = sadd.s32 %s213, %s211
          %s215 = smul.addr %s214, 4
          %s216 = scalar_lea.vmem %s1, %s215
        $region48: #{tpu_custom_call.1} parent=43 // pred_fallthru
          _
      $region44: #{tpu_custom_call.1} parent=5 // pred_fallthru
        _
    $region6: #{tpu_custom_call.1} parent=1 // loop_footer
      %s14 = sadd.s32 1, %s10
    $region7: #{tpu_custom_call.1} parent=1 // loop_footer_branch
      %9 = sbr.rel target = $region3
    $region8: #{tpu_custom_call.1} parent=1 // loop_exit
      _
    %217 = vsyncpa [#allocation4], 1
    %s218 = scalar_lea.sflag [#allocation4], 1
    %219 = vsyncpa %s218, 1

</llo_original>
